<compile_context>
chip_gen: v6e
topology: v6e:2x2x1
jax: 0.10.0
libtpu: 0.0.40
codegen_flags: <defaults>
</compile_context>

<pallas_src>
import jax
import jax.numpy as jnp
from jax.experimental import pallas as pl
from jax.experimental.pallas import tpu as pltpu


def _round_up(x, m):
    return ((x + m - 1) // m) * m


def _cond_embed_kernel(x_ref, w1_ref, b1_ref, w2_ref, b2_ref, o_ref):
    # x_ref : (TB, Cin)  streamed batch tile (input dtype, e.g. f32)
    # w1_ref: (Cin, CP)  resident, bf16
    # b1_ref: (1, CP)    resident, f32
    # w2_ref: (CP, CP)   resident, bf16
    # b2_ref: (1, CP)    resident, f32
    # o_ref : (TB, CP)   streamed output tile
    x = x_ref[...].astype(jnp.bfloat16)                       # bf16 into the MXU
    h = jnp.dot(x, w1_ref[...], preferred_element_type=jnp.float32)
    h = jnp.maximum(h + b1_ref[...], 0.0)                     # bias + ReLU in f32
    o = jnp.dot(h.astype(jnp.bfloat16), w2_ref[...],
                preferred_element_type=jnp.float32)
    o_ref[...] = (o + b2_ref[...]).astype(o_ref.dtype)


def _vmem_capacity_bytes(default=64 << 20):
    try:
        info = pltpu.get_tpu_info()
        return int(getattr(info, "vmem_capacity_bytes", default))
    except Exception:
        return default


def prepare_condition_embed_params(w1, b1, w2, b2, *, weight_dtype=jnp.bfloat16):
    """One-time (init-time) padding + cast of the ConditionEmbed parameters.

    Channels are zero-padded to a lane-dense multiple of 128 so every output
    store is an unmasked full-vreg store; zero padding keeps the real output
    columns exact (padded hidden columns are ReLU(0)=0, padded w2 rows are 0).
    Weights go to bf16 for the MXU; biases stay f32.
    """
    in_channel, out_channel = w1.shape
    cp = _round_up(out_channel, 128)
    pad_c = cp - out_channel
    w1p = jnp.pad(w1, ((0, 0), (0, pad_c))).astype(weight_dtype)
    w2p = jnp.pad(w2, ((0, pad_c), (0, pad_c))).astype(weight_dtype)
    b1p = jnp.pad(b1.reshape(1, -1), ((0, 0), (0, pad_c))).astype(jnp.float32)
    b2p = jnp.pad(b2.reshape(1, -1), ((0, 0), (0, pad_c))).astype(jnp.float32)
    return dict(w1=w1p, b1=b1p, w2=w2p, b2=b2p,
                in_channel=in_channel, out_channel=out_channel)


def condition_embed(x, params, *, max_batch_tile=4096):
    """Pallas implementation of ConditionEmbed.forward.

    x : any shape flattening to (-1, in_channel)
    params : output of prepare_condition_embed_params (padded, bf16 weights)
    returns: (B, out_channel, 1, 1) like the PyTorch module.
    """
    in_channel = params["in_channel"]
    out_channel = params["out_channel"]
    w1p, b1p, w2p, b2p = params["w1"], params["b1"], params["w2"], params["b2"]
    cp = w1p.shape[1]

    x2d = x.reshape(-1, in_channel)                 # x.view(-1, in_channel)
    batch = x2d.shape[0]
    out_dtype = x2d.dtype

    # Sublane multiple for the streamed dtype (8 f32, 16 bf16, 32 int8/fp8).
    sub = max(8, 32 // jnp.dtype(x2d.dtype).itemsize)

    # Balanced batch tiling; even number of >= 2 grid steps when the batch is
    # large enough, so v7x's two TensorCores both get work.
    n_steps = pl.cdiv(batch, max_batch_tile)
    if batch >= 2 * sub:
        n_steps = max(n_steps, 2)
    if n_steps > 1:
        n_steps = 2 * ((n_steps + 1) // 2)
    tb = _round_up(pl.cdiv(batch, n_steps), sub)
    b_pad = _round_up(batch, tb)
    if b_pad != batch:
        x2d = jnp.pad(x2d, ((0, b_pad - batch), (0, 0)))
    grid = (b_pad // tb,)

    # VMEM budget: double-buffered streamed tiles + resident (double-buffered)
    # weights/biases; never clamped below the footprint; ceiling from the chip.
    x_bytes = jnp.dtype(x2d.dtype).itemsize
    o_bytes = jnp.dtype(out_dtype).itemsize
    w_bytes = jnp.dtype(w1p.dtype).itemsize
    bias_bytes = jnp.dtype(b1p.dtype).itemsize
    tile_bytes = tb * in_channel * x_bytes + tb * cp * o_bytes
    weight_bytes = (in_channel * cp + cp * cp) * w_bytes + 2 * cp * bias_bytes
    footprint = 2 * tile_bytes + 2 * weight_bytes
    ceiling = max(4 << 20, _vmem_capacity_bytes() - (16 << 20))
    vmem_bytes = int(min(max(footprint + (1 << 20), 4 << 20), ceiling))

    out2d = pl.pallas_call(
        _cond_embed_kernel,
        out_shape=jax.ShapeDtypeStruct((b_pad, cp), out_dtype),
        grid=grid,
        in_specs=[
            pl.BlockSpec((tb, in_channel), lambda i: (i, 0)),   # streamed x
            pl.BlockSpec((in_channel, cp), lambda i: (0, 0)),   # resident w1
            pl.BlockSpec((1, cp),          lambda i: (0, 0)),   # resident b1
            pl.BlockSpec((cp, cp),         lambda i: (0, 0)),   # resident w2
            pl.BlockSpec((1, cp),          lambda i: (0, 0)),   # resident b2
        ],
        out_specs=pl.BlockSpec((tb, cp), lambda i: (i, 0)),
        compiler_params=pltpu.CompilerParams(
            dimension_semantics=("parallel",),
            vmem_limit_bytes=vmem_bytes,
        ),
    )(x2d, w1p, b1p, w2p, b2p)

    # Slice off batch / channel padding, then x.view(-1, out_channel, 1, 1).
    return out2d[:batch, :out_channel].reshape(-1, out_channel, 1, 1)


def _reference(x, w1, b1, w2, b2):
    in_channel, out_channel = w1.shape
    x2d = x.reshape(-1, in_channel).astype(jnp.float32)
    h = jnp.maximum(x2d @ w1 + b1, 0.0)
    o = h @ w2 + b2
    return o.reshape(-1, out_channel, 1, 1)


if __name__ == "__main__":
    # Small, deterministic synthetic setup.
    in_channel = 4       # e.g. number of condition classes (one-hot)
    out_channel = 32
    batch = 16           # small, but gives a 2-step grid (exercises pipelining)

    key = jax.random.PRNGKey(0)
    k_x, k_w1, k_b1, k_w2, k_b2 = jax.random.split(key, 5)

    x = jax.random.normal(k_x, (batch, in_channel), dtype=jnp.float32)

    # Deterministic parameter init (uniform, like PyTorch's default Linear
    # init scale 1/sqrt(fan_in)); synthetic weights, no checkpoint load.
    lim1 = 1.0 / jnp.sqrt(jnp.float32(in_channel))
    lim2 = 1.0 / jnp.sqrt(jnp.float32(out_channel))
    w1 = jax.random.uniform(k_w1, (in_channel, out_channel),
                            minval=-lim1, maxval=lim1, dtype=jnp.float32)
    b1 = jax.random.uniform(k_b1, (out_channel,),
                            minval=-lim1, maxval=lim1, dtype=jnp.float32)
    w2 = jax.random.uniform(k_w2, (out_channel, out_channel),
                            minval=-lim2, maxval=lim2, dtype=jnp.float32)
    b2 = jax.random.uniform(k_b2, (out_channel,),
                            minval=-lim2, maxval=lim2, dtype=jnp.float32)

    params = prepare_condition_embed_params(w1, b1, w2, b2)   # once, at init
    out = condition_embed(x, params)
    out = jax.block_until_ready(out)

    ref = _reference(x, w1, b1, w2, b2)
    assert out.shape == (batch, out_channel, 1, 1), out.shape
    # bf16 MXU inputs with f32 accumulation -> compare against the f32
    # reference with a bf16-appropriate tolerance.
    max_err = float(jnp.max(jnp.abs(out - ref)))
    assert jnp.allclose(out, ref, atol=3e-2, rtol=3e-2), (
        f"mismatch vs reference (max abs err {max_err})")

    print("KERNEL_OK")
</pallas_src>

<mosaic_0001>
module attributes {stable_mosaic.version = 11 : i64} {
  func.func @_cond_embed_kernel(%arg0: i32, %arg1: memref<8x4xf32, #tpu.memory_space<vmem>>, %arg2: memref<4x128xbf16, #tpu.memory_space<vmem>>, %arg3: memref<1x128xf32, #tpu.memory_space<vmem>>, %arg4: memref<128x128xbf16, #tpu.memory_space<vmem>>, %arg5: memref<1x128xf32, #tpu.memory_space<vmem>>, %arg6: memref<8x128xf32, #tpu.memory_space<vmem>>) attributes {dimension_semantics = [#tpu.dimension_semantics<parallel>], iteration_bounds = array<i64: 2>, scalar_prefetch = 0 : i64, scratch_operands = 0 : i64, tpu.core_type = #tpu.core_type<tc>, window_params = [{transform_indices = @transform_0, window_bounds = array<i64: 8, 4>}, {pipeline_mode = #tpu.pipeline_mode<synchronous>, transform_indices = @transform_1, window_bounds = array<i64: 4, 128>}, {pipeline_mode = #tpu.pipeline_mode<synchronous>, transform_indices = @transform_2, window_bounds = array<i64: 1, 128>}, {pipeline_mode = #tpu.pipeline_mode<synchronous>, transform_indices = @transform_3, window_bounds = array<i64: 128, 128>}, {pipeline_mode = #tpu.pipeline_mode<synchronous>, transform_indices = @transform_4, window_bounds = array<i64: 1, 128>}, {transform_indices = @transform_5, window_bounds = array<i64: 8, 128>}]} {
    %c0 = arith.constant 0 : index
    %c0_0 = arith.constant 0 : index
    %0 = vector.load %arg1[%c0, %c0_0] : memref<8x4xf32, #tpu.memory_space<vmem>>, vector<8x4xf32>
    %1 = arith.truncf %0 : vector<8x4xf32> to vector<8x4xbf16>
    %c0_1 = arith.constant 0 : index
    %c0_2 = arith.constant 0 : index
    %2 = vector.load %arg2[%c0_1, %c0_2] : memref<4x128xbf16, #tpu.memory_space<vmem>>, vector<4x128xbf16>
    %cst = arith.constant dense<0.000000e+00> : vector<8x128xf32>
    %3 = tpu.matmul %1, %2, %cst {dimension_numbers = #tpu.dot_dimension_numbers<[1], [0], [0], [1], [0, 0, 1, 1], [], []>} : vector<8x4xbf16>, vector<4x128xbf16>, vector<8x128xf32> -> vector<8x128xf32>
    %c0_3 = arith.constant 0 : index
    %c0_4 = arith.constant 0 : index
    %4 = vector.load %arg3[%c0_3, %c0_4] : memref<1x128xf32, #tpu.memory_space<vmem>>, vector<1x128xf32>
    %5 = vector.broadcast %4 : vector<1x128xf32> to vector<8x128xf32>
    %6 = arith.addf %3, %5 : vector<8x128xf32>
    %cst_5 = arith.constant 0.000000e+00 : f32
    %7 = vector.broadcast %cst_5 : f32 to vector<8x128xf32>
    %8 = arith.maximumf %6, %7 : vector<8x128xf32>
    %9 = arith.truncf %8 : vector<8x128xf32> to vector<8x128xbf16>
    %c0_6 = arith.constant 0 : index
    %c0_7 = arith.constant 0 : index
    %10 = vector.load %arg4[%c0_6, %c0_7] : memref<128x128xbf16, #tpu.memory_space<vmem>>, vector<128x128xbf16>
    %cst_8 = arith.constant dense<0.000000e+00> : vector<8x128xf32>
    %11 = tpu.matmul %9, %10, %cst_8 {dimension_numbers = #tpu.dot_dimension_numbers<[1], [0], [0], [1], [0, 0, 1, 1], [], []>} : vector<8x128xbf16>, vector<128x128xbf16>, vector<8x128xf32> -> vector<8x128xf32>
    %c0_9 = arith.constant 0 : index
    %c0_10 = arith.constant 0 : index
    %12 = vector.load %arg5[%c0_9, %c0_10] : memref<1x128xf32, #tpu.memory_space<vmem>>, vector<1x128xf32>
    %13 = vector.broadcast %12 : vector<1x128xf32> to vector<8x128xf32>
    %14 = arith.addf %11, %13 : vector<8x128xf32>
    %c0_11 = arith.constant 0 : index
    %c0_12 = arith.constant 0 : index
    %15 = vector.load %arg6[%c0_11, %c0_12] : memref<8x128xf32, #tpu.memory_space<vmem>>, vector<8x128xf32>
    tpu.vector_store %arg6[%c0_11, %c0_12], %14 {strides = array<i32>} : memref<8x128xf32, #tpu.memory_space<vmem>>, vector<8x128xf32>,
    return
  }
  func.func @transform_0(%arg0: i32) -> (i32, i32) {
    %c0_i32 = arith.constant 0 : i32
    %c0_i32_0 = arith.constant 0 : i32
    return %arg0, %c0_i32 : i32, i32
  }
  func.func @transform_1(%arg0: i32) -> (i32, i32) {
    %c0_i32 = arith.constant 0 : i32
    %c0_i32_0 = arith.constant 0 : i32
    %c0_i32_1 = arith.constant 0 : i32
    return %c0_i32, %c0_i32_0 : i32, i32
  }
  func.func @transform_2(%arg0: i32) -> (i32, i32) {
    %c0_i32 = arith.constant 0 : i32
    %c0_i32_0 = arith.constant 0 : i32
    %c0_i32_1 = arith.constant 0 : i32
    return %c0_i32, %c0_i32_0 : i32, i32
  }
  func.func @transform_3(%arg0: i32) -> (i32, i32) {
    %c0_i32 = arith.constant 0 : i32
    %c0_i32_0 = arith.constant 0 : i32
    %c0_i32_1 = arith.constant 0 : i32
    return %c0_i32, %c0_i32_0 : i32, i32
  }
  func.func @transform_4(%arg0: i32) -> (i32, i32) {
    %c0_i32 = arith.constant 0 : i32
    %c0_i32_0 = arith.constant 0 : i32
    %c0_i32_1 = arith.constant 0 : i32
    return %c0_i32, %c0_i32_0 : i32, i32
  }
  func.func @transform_5(%arg0: i32) -> (i32, i32) {
    %c0_i32 = arith.constant 0 : i32
    %c0_i32_0 = arith.constant 0 : i32
    return %arg0, %c0_i32 : i32, i32
  }
}

</mosaic_0001>

<llo_original>
// kernel: tpu_custom_call.1
$region0: #{tpu_custom_call.1}
  #allocation0 [shape = 'u32[]', space=smem, size = 0x4, offset = 0x4, fixed_abs, tag = 'smem constant byte address 0x4 - core index']
  #allocation1 [shape = 'u32[144,128]{1,0:T(1,128)}', space=vmem, size = 0x12000, scoped, tag = 'internal scratch']
  %s0 = inlined_call_operand.vmem [shape: f32[16,4], index: 0, kind: input, shape index: {}]
  %s1 = inlined_call_operand.vmem [shape: bf16[4,128], index: 1, kind: input, shape index: {}]
  %s2 = inlined_call_operand.vmem [shape: f32[1,128], index: 2, kind: input, shape index: {}]
  %s3 = inlined_call_operand.hbm [shape: bf16[128,128], index: 3, kind: input, shape index: {}]
  %s4 = inlined_call_operand.vmem [shape: f32[1,128], index: 4, kind: input, shape index: {}]
  %s5 = inlined_call_operand.hbm [shape: f32[16,128], index: 5, kind: output, shape index: {}]
  %s6 = sld [smem:[#allocation0]]
  $region57: #{tpu_custom_call.1} parent=0
    _
  %s8 = ssub.s32 1, %s6
  %s9 = scalar_select 0, %s8, %s6
  $region1: #{tpu_custom_call.1} parent=0
    #allocation2 [shape = 'u8[32768]{0}', space=vmem, size = 0x8000, scoped, tag = 'input window, operand 3, single buffered']
    #allocation3 [shape = 's32[2]{0}', space=sflag, size = 0x8, scoped, tag = 'scoped memory for tpu_custom_call.1']
    #allocation4 [shape = 's32[2]{0}', space=sflag, size = 0x8, scoped, tag = 'scoped memory for tpu_custom_call.1']
    #allocation5 [shape = 'u8[8192]{0}', space=vmem, size = 0x2000, scoped, tag = 'output window, operand 0']
    %10 = vsyncpa [#allocation3], 0
    %11 = vsyncpa [#allocation4], 0
    %s12 = scalar_lea.sflag [#allocation4], 1
    %13 = vsyncpa %s12, 0
    loop: start=0, step=1, limit=4
    $region2: #{tpu_custom_call.1} parent=1 // loop_pre_header
      _
    $region3: #{tpu_custom_call.1} parent=1 // loop_header
      %s15 = sphi 0, %s19
      %p16 = scmp.ge.s32.totalorder %s15, 4
      %s25 = sphi 0, %s27
      %s28 = sphi 0, %s25
      %s29 = sphi 0, %s28
      %s45 = sphi 0, %s29
      %s49 = sphi 0, %s49
      %s51 = sphi 0, %s49
      %s52 = sphi 0, %s51
      %s66 = sphi 0, %s52
      %s70 = sphi 0, %s70
      %s72 = sphi 0, %s70
      %s73 = sphi 0, %s72
      %s87 = sphi 0, %s73
      %s91 = sphi 0, %s91
      %s93 = sphi 0, %s91
      %s94 = sphi 0, %s93
      %s108 = sphi 0, %s94
      %s112 = sphi 0, %s112
      %s114 = sphi 0, %s112
      %s115 = sphi 0, %s114
      %s129 = sphi 0, %s115
      %s135 = sphi 0, %s137
      %s138 = sphi 0, %s135
      %s139 = sphi 0, %s138
      %s155 = sphi 0, %s139
    $region4: #{tpu_custom_call.1} parent=1 // loop_header_branch
      %18 = sbr.rel (%p16) target = $region8
    $region5: #{tpu_custom_call.1} parent=1 // loop_body
      %s20 = ssub.s32 %s15, 1
      %s21 = ssub.s32 %s15, 2
      %s22 = sadd.s32 %s15, 1
      %s23 = ssub.s32 %s15, %s22
      %p24 = scmp.eq.s32.totalorder %s23, 0
      %s26 = sadd.s32 %s25, 1
      %s27 = scalar_select %p24, %s25, %s26
      %p30 = pneg %p24
      %p31 = scmp.eq.s32.totalorder %s15, 1
      %p32 = por %p30, %p31
      %p33 = scmp.ne.s32.totalorder %s25, %s28
      %p34 = scmp.eq.s32.totalorder %s15, 0
      %p35 = por %p33, %p34
      %p36 = scmp.ne.s32.totalorder %s25, %s28
      %p37 = scmp.eq.s32.totalorder %s20, 1
      %p38 = por %p36, %p37
      %p39 = scmp.ne.s32.totalorder %s28, %s29
      %p40 = scmp.eq.s32.totalorder %s20, 0
      %p41 = por %p39, %p40
      %p42 = scmp.ne.s32.totalorder %s28, %s29
      %p43 = scmp.eq.s32.totalorder %s21, 1
      %p44 = por %p42, %p43
      %p46 = scmp.ne.s32.totalorder %s29, %s45
      %p47 = scmp.eq.s32.totalorder %s21, 0
      %p48 = por %p46, %p47
      %s50 = sadd.s32 %s49, 1
      %p53 = scmp.eq.s32.totalorder %s15, 1
      %p54 = scmp.ne.s32.totalorder %s49, %s51
      %p55 = scmp.eq.s32.totalorder %s15, 0
      %p56 = por %p54, %p55
      %p57 = scmp.ne.s32.totalorder %s49, %s51
      %p58 = scmp.eq.s32.totalorder %s20, 1
      %p59 = por %p57, %p58
      %p60 = scmp.ne.s32.totalorder %s51, %s52
      %p61 = scmp.eq.s32.totalorder %s20, 0
      %p62 = por %p60, %p61
      %p63 = scmp.ne.s32.totalorder %s51, %s52
      %p64 = scmp.eq.s32.totalorder %s21, 1
      %p65 = por %p63, %p64
      %p67 = scmp.ne.s32.totalorder %s52, %s66
      %p68 = scmp.eq.s32.totalorder %s21, 0
      %p69 = por %p67, %p68
      %s71 = sadd.s32 %s70, 1
      %p74 = scmp.eq.s32.totalorder %s15, 1
      %p75 = scmp.ne.s32.totalorder %s70, %s72
      %p76 = scmp.eq.s32.totalorder %s15, 0
      %p77 = por %p75, %p76
      %p78 = scmp.ne.s32.totalorder %s70, %s72
      %p79 = scmp.eq.s32.totalorder %s20, 1
      %p80 = por %p78, %p79
      %p81 = scmp.ne.s32.totalorder %s72, %s73
      %p82 = scmp.eq.s32.totalorder %s20, 0
      %p83 = por %p81, %p82
      %p84 = scmp.ne.s32.totalorder %s72, %s73
      %p85 = scmp.eq.s32.totalorder %s21, 1
      %p86 = por %p84, %p85
      %p88 = scmp.ne.s32.totalorder %s73, %s87
      %p89 = scmp.eq.s32.totalorder %s21, 0
      %p90 = por %p88, %p89
      %s92 = sadd.s32 %s91, 1
      %p95 = scmp.eq.s32.totalorder %s15, 1
      %p96 = scmp.ne.s32.totalorder %s91, %s93
      %p97 = scmp.eq.s32.totalorder %s15, 0
      %p98 = por %p96, %p97
      %p99 = scmp.ne.s32.totalorder %s91, %s93
      %p100 = scmp.eq.s32.totalorder %s20, 1
      %p101 = por %p99, %p100
      %p102 = scmp.ne.s32.totalorder %s93, %s94
      %p103 = scmp.eq.s32.totalorder %s20, 0
      %p104 = por %p102, %p103
      %p105 = scmp.ne.s32.totalorder %s93, %s94
      %p106 = scmp.eq.s32.totalorder %s21, 1
      %p107 = por %p105, %p106
      %p109 = scmp.ne.s32.totalorder %s94, %s108
      %p110 = scmp.eq.s32.totalorder %s21, 0
      %p111 = por %p109, %p110
      %s113 = sadd.s32 %s112, 1
      %p116 = scmp.eq.s32.totalorder %s15, 1
      %p117 = scmp.ne.s32.totalorder %s112, %s114
      %p118 = scmp.eq.s32.totalorder %s15, 0
      %p119 = por %p117, %p118
      %p120 = scmp.ne.s32.totalorder %s112, %s114
      %p121 = scmp.eq.s32.totalorder %s20, 1
      %p122 = por %p120, %p121
      %p123 = scmp.ne.s32.totalorder %s114, %s115
      %p124 = scmp.eq.s32.totalorder %s20, 0
      %p125 = por %p123, %p124
      %p126 = scmp.ne.s32.totalorder %s114, %s115
      %p127 = scmp.eq.s32.totalorder %s21, 1
      %p128 = por %p126, %p127
      %p130 = scmp.ne.s32.totalorder %s115, %s129
      %p131 = scmp.eq.s32.totalorder %s21, 0
      %p132 = por %p130, %p131
      %s133 = ssub.s32 %s15, %s22
      %p134 = scmp.eq.s32.totalorder %s133, 0
      %s136 = sadd.s32 %s135, 1
      %s137 = scalar_select %p134, %s135, %s136
      %p140 = pneg %p134
      %p141 = scmp.eq.s32.totalorder %s15, 1
      %p142 = por %p140, %p141
      %p143 = scmp.ne.s32.totalorder %s135, %s138
      %p144 = scmp.eq.s32.totalorder %s15, 0
      %p145 = por %p143, %p144
      %p146 = scmp.ne.s32.totalorder %s135, %s138
      %p147 = scmp.eq.s32.totalorder %s20, 1
      %p148 = por %p146, %p147
      %p149 = scmp.ne.s32.totalorder %s138, %s139
      %p150 = scmp.eq.s32.totalorder %s20, 0
      %p151 = por %p149, %p150
      %p152 = scmp.ne.s32.totalorder %s138, %s139
      %p153 = scmp.eq.s32.totalorder %s21, 1
      %p154 = por %p152, %p153
      %p156 = scmp.ne.s32.totalorder %s139, %s155
      %p157 = scmp.eq.s32.totalorder %s21, 0
      %p158 = por %p156, %p157
      %p159 = scmp.le.s32.totalorder 1, %s15
      %p160 = scmp.lt.s32.totalorder %s15, 3
      %p161 = pnand %p159, %p160
      %p162 = pneg %p161
      // Predicated region
      $region9: #{tpu_custom_call.1} parent=5 // pred_check
        _
      $region10: #{tpu_custom_call.1} parent=5 // pred_check_branch
        %164 = sbr.rel (%p161) target = $region12
      $region11: #{tpu_custom_call.1} parent=5 // pred_region
        %s165 = ssub.s32 %s15, 1
        // Predicated region
        $region13: #{tpu_custom_call.1} parent=11 // pred_check
          %p166 = pneg %p62
        $region14: #{tpu_custom_call.1} parent=11 // pred_check_branch
          %168 = sbr.rel (%p166) target = $region16
        $region15: #{tpu_custom_call.1} parent=11 // pred_region
          _
        $region16: #{tpu_custom_call.1} parent=11 // pred_fallthru
          _
        // Predicated region
        $region17: #{tpu_custom_call.1} parent=11 // pred_check
          %p169 = pneg %p83
        $region18: #{tpu_custom_call.1} parent=11 // pred_check_branch
          %171 = sbr.rel (%p169) target = $region20
        $region19: #{tpu_custom_call.1} parent=11 // pred_region
          _
        $region20: #{tpu_custom_call.1} parent=11 // pred_fallthru
          _
        // Predicated region
        $region21: #{tpu_custom_call.1} parent=11 // pred_check
          %p172 = pneg %p104
        $region22: #{tpu_custom_call.1} parent=11 // pred_check_branch
          %174 = sbr.rel (%p172) target = $region24
        $region23: #{tpu_custom_call.1} parent=11 // pred_region
          %s176 = ssub.s32 1024, 1024
          %177 = vsyncadd [#allocation3], %s176
          %s178 = sshll.u32 [#allocation2], 4
          %s179 = int_to_ptr.vmem [resolvable:$true] %s178
          %184 = dma.hbm_to_vmem [thread:$0]  %s3, 1024, %s179, [#allocation3], 64, 64, 4
        $region24: #{tpu_custom_call.1} parent=11 // pred_fallthru
          _
        // Predicated region
        $region25: #{tpu_custom_call.1} parent=11 // pred_check
          %p185 = pneg %p125
        $region26: #{tpu_custom_call.1} parent=11 // pred_check_branch
          %187 = sbr.rel (%p185) target = $region28
        $region27: #{tpu_custom_call.1} parent=11 // pred_region
          _
        $region28: #{tpu_custom_call.1} parent=11 // pred_fallthru
          _
      $region12: #{tpu_custom_call.1} parent=5 // pred_fallthru
        _
      %p188 = scmp.lt.s32.totalorder %s15, 2
      // Predicated region
      $region29: #{tpu_custom_call.1} parent=5 // pred_check
        %p189 = pneg %p188
      $region30: #{tpu_custom_call.1} parent=5 // pred_check_branch
        %191 = sbr.rel (%p189) target = $region32
      $region31: #{tpu_custom_call.1} parent=5 // pred_region
        // Predicated region
        $region33: #{tpu_custom_call.1} parent=31 // pred_check
          %p192 = pneg %p35
        $region34: #{tpu_custom_call.1} parent=31 // pred_check_branch
          %194 = sbr.rel (%p192) target = $region36
        $region35: #{tpu_custom_call.1} parent=31 // pred_region
          %p195 = scmp.lt.s32.totalorder %s15, 1
          %s196 = scalar_select %p195, %s15, 1
          %s197 = smul.addr %s196, 8
          %s198 = scalar_lea.vmem %s0, %s197
        $region36: #{tpu_custom_call.1} parent=31 // pred_fallthru
          _
      $region32: #{tpu_custom_call.1} parent=5 // pred_fallthru
        _
      %p199 = scmp.le.s32.totalorder 1, %s15
      %p200 = scmp.lt.s32.totalorder %s15, 3
      %p201 = pnand %p199, %p200
      %p202 = pneg %p201
      // Predicated region
      $region37: #{tpu_custom_call.1} parent=5 // pred_check
        _
      $region38: #{tpu_custom_call.1} parent=5 // pred_check_branch
        %204 = sbr.rel (%p201) target = $region40
      $region39: #{tpu_custom_call.1} parent=5 // pred_region
        %s205 = ssub.s32 %s15, 1
        // Predicated region
        $region41: #{tpu_custom_call.1} parent=39 // pred_check
          %p206 = pneg %p104
        $region42: #{tpu_custom_call.1} parent=39 // pred_check_branch
          %208 = sbr.rel (%p206) target = $region44
        $region43: #{tpu_custom_call.1} parent=39 // pred_region
          %209 = dma.done [#allocation3], 1024
        $region44: #{tpu_custom_call.1} parent=39 // pred_fallthru
          _
        %p210 = scmp.lt.s32.totalorder %s20, 1
        %s211 = scalar_select %p210, %s20, 1
        %s212 = smul.addr %s211, 8
        %s213 = scalar_lea.vmem %s0, %s212
        %p214 = pneg %p41
        %p215 = pneg %p38
        %p216 = pneg %p62
        %p217 = pneg %p59
        %p218 = pneg %p83
        %p219 = pneg %p80
        %p220 = pneg %p104
        %p221 = pneg %p101
        %p222 = pneg %p125
        %p223 = pneg %p122
        %p224 = pneg %p151
        %p225 = pneg %p148
        %s226 = sand.u32 %s138, 1
        %s227 = scalar_lea.sflag [#allocation4], %s226
        %s228 = sand.u32 %s138, 1
        %s229 = smul.addr %s228, 8
        %s230 = scalar_lea.vmem [#allocation5], %s229
        %p231 = scmp.lt.s32.totalorder %s20, 1
        %s232 = scalar_select %p231, %s20, 1
        %s233 = smul.addr %s232, 8
        %s234 = scalar_lea.vmem %s0, %s233
        %v236 = vld [vmem:[%s234] sm:$0xff]
        %v237 = vpack.c.bf16 %v236, %v236
        %v238 = vld [vmem:[%s1] sm:$0x3]
        %v239 = vld [vmem:[%s2] sm:$0x1]
        %v241 = vlaneseq
        %v242 = vshrl.u32 %v241, 7
        %v243 = vsub.s32 0, %v242
        %v244 = vrot.slane %v239, %v243
        %vm246 = vcmask 31744
        %v248 = vsel %vm246, %v237, 0
        %vm250 = vcmask 1041408
        %v252 = vsel %vm250, %v238, 0
        %254 = vmatprep.subr.bf16.mxu0 0
        %255 = vmatpush1.bf16.msra.mxu0 0
        %256 = vmatprep.subr.bf16.mxu0 0
        %257 = vmatpush1.bf16.msra.mxu0 0
        %258 = vmatprep.subr.bf16.mxu0 0
        %259 = vmatpush1.bf16.msra.mxu0 0
        %260 = vmatprep.subr.bf16.mxu0 0
        %261 = vmatpush1.bf16.msra.mxu0 0
        %262 = vmatprep.subr.bf16.mxu0 0
        %263 = vmatpush1.bf16.msra.mxu0 0
        %264 = vmatprep.subr.bf16.mxu0 0
        %265 = vmatpush1.bf16.msra.mxu0 0
        %266 = vmatprep.subr.bf16.mxu0 0
        %267 = vmatpush1.bf16.msra.mxu0 0
        %268 = vmatprep.subr.bf16.mxu0 0
        %269 = vmatpush1.bf16.msra.mxu0 %v252
        %270 = vmatprep.subr.bf16.mxu0 0
        %271 = vmatpush2.bf16.msra.mxu0 0
        %272 = vmatprep.subr.bf16.mxu0 0
        %273 = vmatpush2.bf16.msra.mxu0 0
        %274 = vmatprep.subr.bf16.mxu0 0
        %275 = vmatpush2.bf16.msra.mxu0 0
        %276 = vmatprep.subr.bf16.mxu0 0
        %277 = vmatpush2.bf16.msra.mxu0 0
        %278 = vmatprep.subr.bf16.mxu0 0
        %279 = vmatpush2.bf16.msra.mxu0 0
        %280 = vmatprep.subr.bf16.mxu0 0
        %281 = vmatpush2.bf16.msra.mxu0 0
        %282 = vmatprep.subr.bf16.mxu0 0
        %283 = vmatpush2.bf16.msra.mxu0 0
        %284 = vmatprep.subr.bf16.mxu0 0
        %285 = vmatpush2.bf16.msra.mxu0 0
        %286 = vmatprep.mubr.bf16.mxu0 0
        %287 = vmatmul.mubr.bf16.gmra.mxu0 %v248
        %v288 = vpop.f32.mrf.mxu0
        %v289 = vadd.f32 %v244, %v288
        %v290 = vpop.f32.mrf.mxu0
        %v291 = vpop.f32.mrf.mxu0
        %v292 = vpop.f32.mrf.mxu0
        %293 = vdwg.mxu0
        %v294 = vmax.f32 %v289, 0.0
        %v295 = vpack.c.bf16 %v294, %v294
        %v296 = vld [vmem:[#allocation2] sm:$0xf]
        %v297 = vld [vmem:[#allocation2 + $0x4] sm:$0xf]
        %v298 = vld [vmem:[#allocation2 + $0x8] sm:$0xf]
        %v299 = vld [vmem:[#allocation2 + $0xc] sm:$0xf]
        %v300 = vld [vmem:[#allocation2 + $0x10] sm:$0xf]
        %v301 = vld [vmem:[#allocation2 + $0x14] sm:$0xf]
        %v302 = vld [vmem:[#allocation2 + $0x18] sm:$0xf]
        %v303 = vld [vmem:[#allocation2 + $0x1c] sm:$0xf]
        %v304 = vld [vmem:[#allocation2 + $0x20] sm:$0xf]
        %v305 = vld [vmem:[#allocation2 + $0x24] sm:$0xf]
        %v306 = vld [vmem:[#allocation2 + $0x28] sm:$0xf]
        %v307 = vld [vmem:[#allocation2 + $0x2c] sm:$0xf]
        %v308 = vld [vmem:[#allocation2 + $0x30] sm:$0xf]
        %v309 = vld [vmem:[#allocation2 + $0x34] sm:$0xf]
        %v310 = vld [vmem:[#allocation2 + $0x38] sm:$0xf]
        %v311 = vld [vmem:[#allocation2 + $0x3c] sm:$0xf]
        %v312 = vld [vmem:[%s4] sm:$0x1]
        %v314 = vlaneseq
        %v315 = vshrl.u32 %v314, 7
        %v316 = vsub.s32 0, %v315
        %v317 = vrot.slane %v312, %v316
        %v335 = vunpack.c.l.b16 %v296
        %v336 = vunpack.c.l.b16 %v297
        %v337 = vunpack.c.l.b16 %v298
        %v338 = vunpack.c.l.b16 %v299
        %v339 = vunpack.c.l.b16 %v300
        %v340 = vunpack.c.l.b16 %v301
        %v341 = vunpack.c.l.b16 %v302
        %v342 = vunpack.c.l.b16 %v303
        %v343 = vunpack.c.l.b16 %v304
        %v344 = vunpack.c.l.b16 %v305
        %v345 = vunpack.c.l.b16 %v306
        %v346 = vunpack.c.l.b16 %v307
        %v347 = vunpack.c.l.b16 %v308
        %v348 = vunpack.c.l.b16 %v309
        %v349 = vunpack.c.l.b16 %v310
        %v350 = vunpack.c.l.b16 %v311
        %v351 = vpack.c.b16 %v336, %v335
        %v352 = vpack.c.b16 %v338, %v337
        %v353 = vpack.c.b16 %v340, %v339
        %v354 = vpack.c.b16 %v342, %v341
        %v355 = vpack.c.b16 %v344, %v343
        %v356 = vpack.c.b16 %v346, %v345
        %v357 = vpack.c.b16 %v348, %v347
        %v358 = vpack.c.b16 %v350, %v349
        %367 = vmatprep.subr.bf16.mxu0 0
        %368 = vmatpush1.bf16.msra.mxu0 %v358
        %369 = vmatprep.subr.bf16.mxu0 0
        %370 = vmatpush1.bf16.msra.mxu0 %v357
        %371 = vmatprep.subr.bf16.mxu0 0
        %372 = vmatpush1.bf16.msra.mxu0 %v356
        %373 = vmatprep.subr.bf16.mxu0 0
        %374 = vmatpush1.bf16.msra.mxu0 %v355
        %375 = vmatprep.subr.bf16.mxu0 0
        %376 = vmatpush1.bf16.msra.mxu0 %v354
        %377 = vmatprep.subr.bf16.mxu0 0
        %378 = vmatpush1.bf16.msra.mxu0 %v353
        %379 = vmatprep.subr.bf16.mxu0 0
        %380 = vmatpush1.bf16.msra.mxu0 %v352
        %381 = vmatprep.subr.bf16.mxu0 0
        %382 = vmatpush1.bf16.msra.mxu0 %v351
        %383 = vmatprep.subr.bf16.mxu0 0
        %384 = vmatpush2.bf16.msra.mxu0 0
        %385 = vmatprep.subr.bf16.mxu0 0
        %386 = vmatpush2.bf16.msra.mxu0 0
        %387 = vmatprep.subr.bf16.mxu0 0
        %388 = vmatpush2.bf16.msra.mxu0 0
        %389 = vmatprep.subr.bf16.mxu0 0
        %390 = vmatpush2.bf16.msra.mxu0 0
        %391 = vmatprep.subr.bf16.mxu0 0
        %392 = vmatpush2.bf16.msra.mxu0 0
        %393 = vmatprep.subr.bf16.mxu0 0
        %394 = vmatpush2.bf16.msra.mxu0 0
        %395 = vmatprep.subr.bf16.mxu0 0
        %396 = vmatpush2.bf16.msra.mxu0 0
        %397 = vmatprep.subr.bf16.mxu0 0
        %398 = vmatpush2.bf16.msra.mxu0 0
        %399 = vmatprep.mubr.bf16.mxu0 0
        %400 = vmatmul.mubr.bf16.gmra.mxu0 %v295
        %v401 = vpop.f32.mrf.mxu0
        %v402 = vadd.f32 %v317, %v401
        %v403 = vpop.f32.mrf.mxu0
        %v404 = vpop.f32.mrf.mxu0
        %v405 = vpop.f32.mrf.mxu0
        %406 = vdwg.mxu0
        %407 = vst [vmem:[%s230] sm:$0xff] %v402
        %s408 = sand.u32 %s138, 1
        %s409 = scalar_lea.sflag [#allocation4], %s408
        %s410 = sand.u32 %s138, 1
        %s411 = smul.addr %s410, 8
        %s412 = scalar_lea.vmem [#allocation5], %s411
        // Predicated region
        $region45: #{tpu_custom_call.1} parent=39 // pred_check
          %p413 = pneg %p148
        $region46: #{tpu_custom_call.1} parent=39 // pred_check_branch
          %415 = sbr.rel (%p413) target = $region48
        $region47: #{tpu_custom_call.1} parent=39 // pred_region
          %s417 = ssub.s32 128, 128
          %418 = vsyncadd %s409, %s417
          %s419 = smul.addr %s20, 128
          %s420 = scalar_lea.hbm %s5, %s419
          %s422 = sshll.u32 %s412, 4
          %s423 = int_to_ptr.vmem [resolvable:$true] %s422
          %425 = dma.vmem_to_hbm [thread:$0]  %s423, 128, %s420, %s409
        $region48: #{tpu_custom_call.1} parent=39 // pred_fallthru
          _
      $region40: #{tpu_custom_call.1} parent=5 // pred_fallthru
        _
      %p426 = scmp.le.s32.totalorder 2, %s15
      // Predicated region
      $region49: #{tpu_custom_call.1} parent=5 // pred_check
        %p427 = pneg %p426
      $region50: #{tpu_custom_call.1} parent=5 // pred_check_branch
        %429 = sbr.rel (%p427) target = $region52
      $region51: #{tpu_custom_call.1} parent=5 // pred_region
        %s430 = ssub.s32 %s15, 2
        // Predicated region
        $region53: #{tpu_custom_call.1} parent=51 // pred_check
          %p431 = pneg %p154
        $region54: #{tpu_custom_call.1} parent=51 // pred_check_branch
          %433 = sbr.rel (%p431) target = $region56
        $region55: #{tpu_custom_call.1} parent=51 // pred_region
          %s434 = sand.u32 %s139, 1
          %s435 = scalar_lea.sflag [#allocation4], %s434
          %s436 = sand.u32 %s139, 1
          %s437 = smul.addr %s436, 8
          %s438 = scalar_lea.vmem [#allocation5], %s437
          %439 = dma.done %s435, 128
        $region56: #{tpu_custom_call.1} parent=51 // pred_fallthru
          _
      $region52: #{tpu_custom_call.1} parent=5 // pred_fallthru
        _
    $region6: #{tpu_custom_call.1} parent=1 // loop_footer
      %s19 = sadd.s32 1, %s15
    $region7: #{tpu_custom_call.1} parent=1 // loop_footer_branch
      %14 = sbr.rel target = $region3
    $region8: #{tpu_custom_call.1} parent=1 // loop_exit
      _
    %440 = vsyncpa [#allocation3], 1
    %s441 = scalar_lea.sflag [#allocation3], 1
    %442 = vsyncpa %s441, 1
    %443 = vsyncpa [#allocation4], 1
    %s444 = scalar_lea.sflag [#allocation4], 1
    %445 = vsyncpa %s444, 1

</llo_original>
